<compile_context>
chip_gen: v7x
topology: tpu7x:2x2x1
jax: 0.10.0
libtpu: 0.0.40
codegen_flags: <defaults>
</compile_context>

<pallas_src>
import functools

import jax
import jax.numpy as jnp
from jax.experimental import pallas as pl
from jax.experimental.pallas import tpu as pltpu

EPS = 1e-5


def _round_up(x, m):
    return (x + m - 1) // m * m


def _reduction_block_kernel(xs1_ref,   # (K1p, Mt)          bf16  stride-2 3x3 taps of x
                            w1s_ref,   # (2*Cout_p, K1p)    bf16  [conv1 ; 1x1 skip] fused
                            w2_ref,    # (Cout_p, 9*Cout_p) bf16
                            mask_ref,  # (9*Cout_p, Mt)     bf16  conv2 border/wrap masks
                            s1_ref,    # (Cout_p, 1) f32  folded BN1 scale
                            sh1_ref,   # (Cout_p, 1) f32  folded BN1 shift (conv1 bias)
                            s2_ref,    # (Cout_p, 1) f32  folded BN2 scale
                            sh2_ref,   # (Cout_p, 1) f32  folded BN2 shift (conv2 + skip bias)
                            out_ref,   # (Cout_p, Mt) f32
                            *, Wo):
    Cp, Mt = out_ref.shape

    # ---- conv1 (3x3 s2 p1) + 1x1 s2 skip conv as ONE fused MXU matmul ----
    acc = jnp.dot(w1s_ref[...], xs1_ref[...],
                  preferred_element_type=jnp.float32)              # (2*Cp, Mt) f32
    acc1 = acc[:Cp, :]          # conv1 pre-BN
    skip = acc[Cp:, :]          # 1x1 stride-2 skip conv (bias folded into sh2)

    # ---- BN1 (eval mode, folded) + ReLU; (Cp, 1) broadcast along lanes ----
    h = jnp.maximum(acc1 * s1_ref[...] + sh1_ref[...], 0.0)

    # ---- conv2: 3x3 stride-1 pad-1 on h ----
    # A spatial shift by (dh, dw) is a lane roll of the flattened (b, i, j) axis by
    # dh*Wo + dw.  Out-of-image / row-wrap / tile-wrap lanes are exactly the lanes
    # zeroed by the precomputed mask (valid because each tile holds whole images).
    taps = []
    for kh in range(3):
        for kw in range(3):
            off = (kh - 1) * Wo + (kw - 1)
            taps.append(h if off == 0
                        else pltpu.roll(h, shift=(-off) % Mt, axis=1))
    hp = jnp.concatenate(taps, axis=0).astype(jnp.bfloat16) * mask_ref[...]  # (9*Cp, Mt) bf16

    acc2 = jnp.dot(w2_ref[...], hp, preferred_element_type=jnp.float32)
    y = acc2 * s2_ref[...] + sh2_ref[...]      # BN2 (folded) + skip-conv bias

    # ---- residual add + final ReLU (lane-dense store) ----
    out_ref[...] = jnp.maximum(y + skip, 0.0)


@jax.jit
def reduction_basic_block(x_nchw, params):
    """Pallas implementation of ReductionBasicBlock.forward. Input/output NCHW."""
    (w1, b1, g1, be1, m1, v1,
     w2, b2, g2, be2, m2, v2,
     ws, bs) = params

    x = x_nchw.astype(jnp.float32)
    N, Cin, H, W = x.shape
    Cout = w1.shape[-1]
    Ho = (H + 2 - 3) // 2 + 1
    Wo = (W + 2 - 3) // 2 + 1
    img = Ho * Wo
    M = N * img

    Cout_p = _round_up(Cout, 8)
    K1 = 9 * Cin
    K1p = _round_up(K1, 16)       # single pad of the whole K axis (bf16 sublane packing)
    K2 = 9 * Cout_p

    # --- layout glue: stride-2 3x3 taps of x, K ordered (kh, kw, ci), M on lanes ---
    xpad = jnp.pad(x, ((0, 0), (0, 0), (1, 1), (1, 1)))
    taps = []
    for kh in range(3):
        for kw in range(3):
            t = xpad[:, :, kh:kh + 2 * Ho:2, kw:kw + 2 * Wo:2]     # (N, Cin, Ho, Wo)
            taps.append(jnp.transpose(t, (1, 0, 2, 3)).reshape(Cin, M))
    xs1_t = jnp.pad(jnp.concatenate(taps, axis=0),
                    ((0, K1p - K1), (0, 0))).astype(jnp.bfloat16)  # (K1p, M)

    # --- fused [conv1 ; skip] weight, (2*Cout_p, K1p) bf16 ---
    w1r = jnp.transpose(w1, (3, 0, 1, 2)).reshape(Cout, K1)        # (Cout, 9*Cin)
    wsr = ws.reshape(Cin, Cout).T                                  # (Cout, Cin)
    wf = jnp.zeros((2 * Cout_p, K1p), jnp.float32)
    wf = wf.at[:Cout, :K1].set(w1r)
    wf = wf.at[Cout_p:Cout_p + Cout, 4 * Cin:5 * Cin].set(wsr)     # skip = center tap only
    w1s_t = wf.astype(jnp.bfloat16)

    # --- conv2 weight, (Cout_p, 9*Cout_p) bf16, K ordered (kh, kw, c) ---
    w2r = jnp.transpose(w2, (3, 0, 1, 2))                          # (Cout, 3, 3, Cout)
    w2r = jnp.pad(w2r, ((0, Cout_p - Cout), (0, 0), (0, 0), (0, Cout_p - Cout)))
    w2_t = w2r.reshape(Cout_p, K2).astype(jnp.bfloat16)

    # --- fold conv biases + eval-mode BN into per-channel scale/shift (f32) ---
    s1 = g1 / jnp.sqrt(v1 + EPS)
    sh1 = be1 + (b1 - m1) * s1
    s2 = g2 / jnp.sqrt(v2 + EPS)
    sh2 = be2 + (b2 - m2) * s2 + bs        # skip-conv bias folded into BN2 shift

    def col(v):
        return jnp.pad(v.astype(jnp.float32), (0, Cout_p - Cout)).reshape(Cout_p, 1)

    s1c, sh1c, s2c, sh2c = col(s1), col(sh1), col(s2), col(sh2)

    # --- tile selection: whole output images per tile (conv2 roll/mask invariant);
    #     largest tile that fits the VMEM budget; prefer grid >= 2 (pipelining,
    #     v7x dual-TC) and an even program count.
    def tile_bytes(bt):
        mt = bt * img
        return (2 * K1p * mt * 2          # xs1 stream, double-buffered bf16
                + 2 * Cout_p * mt * 4     # out stream, double-buffered f32
                + K2 * mt * 2             # resident conv2 mask (bf16)
                + K2 * mt * 10            # f32 taps + f32 concat + bf16 hp temporaries
                + 4 * Cout_p * mt * 4)    # fused acc / h / y / skip f32 temporaries

    budget = 24 * 2 ** 20                 # conservative across v5e/v6e/v7x
    cands = [bt for bt in range(1, N + 1) if N % bt == 0 and (bt * img) % 128 == 0]
    if cands:
        fits = [bt for bt in cands if tile_bytes(bt) <= budget] or [cands[0]]
        pref = [bt for bt in fits if N // bt >= 2] or fits
        even = [bt for bt in pref if (N // bt) % 2 == 0]
        b_tile = max(even) if even and 2 * max(even) >= max(pref) else max(pref)
    else:
        b_tile = N     # Mt not a multiple of 128 -> lane-masked stores, still correct
    Mt = b_tile * img
    grid = (N // b_tile,)

    # --- precomputed conv2 border/wrap mask (periodic per image, so one tile-sized
    #     mask with a constant index_map covers every grid step) ---
    sp = jnp.arange(Mt, dtype=jnp.int32) % img
    ii = sp // Wo
    jj = sp % Wo
    rows = []
    for kh in range(3):
        for kw in range(3):
            dh, dw = kh - 1, kw - 1
            valid = ((ii + dh >= 0) & (ii + dh < Ho) &
                     (jj + dw >= 0) & (jj + dw < Wo))
            rows.append(jnp.broadcast_to(valid[None, :], (Cout_p, Mt)))
    mask_t = jnp.concatenate(rows, axis=0).astype(jnp.bfloat16)    # (9*Cout_p, Mt)

    # raise the scoped VMEM limit explicitly (v5e default is only 16 MiB)
    vmem_limit = int(min(48 * 2 ** 20, max(32 * 2 ** 20, 2 * tile_bytes(b_tile))))

    kernel = functools.partial(_reduction_block_kernel, Wo=Wo)

    out_t = pl.pallas_call(
        kernel,
        out_shape=jax.ShapeDtypeStruct((Cout_p, M), jnp.float32),
        grid=grid,
        in_specs=[
            pl.BlockSpec((K1p, Mt), lambda g: (0, g)),            # xs1 (streamed)
            pl.BlockSpec((2 * Cout_p, K1p), lambda g: (0, 0)),    # fused weight (resident)
            pl.BlockSpec((Cout_p, K2), lambda g: (0, 0)),         # w2 (resident)
            pl.BlockSpec((K2, Mt), lambda g: (0, 0)),             # conv2 mask (resident)
            pl.BlockSpec((Cout_p, 1), lambda g: (0, 0)),          # s1
            pl.BlockSpec((Cout_p, 1), lambda g: (0, 0)),          # sh1
            pl.BlockSpec((Cout_p, 1), lambda g: (0, 0)),          # s2
            pl.BlockSpec((Cout_p, 1), lambda g: (0, 0)),          # sh2 (+ skip bias)
        ],
        out_specs=pl.BlockSpec((Cout_p, Mt), lambda g: (0, g)),
        compiler_params=pltpu.CompilerParams(
            dimension_semantics=("parallel",),
            vmem_limit_bytes=vmem_limit),
    )(xs1_t, w1s_t, w2_t, mask_t, s1c, sh1c, s2c, sh2c)

    out = out_t[:Cout].reshape(Cout, N, Ho, Wo)
    return jnp.transpose(out, (1, 0, 2, 3))                       # back to NCHW


# ------------------------- pure-JAX references -------------------------
def _conv_nchw(x, w_hwio, b, stride, pad, bf16_operands):
    if bf16_operands:   # mirror the kernel's bf16-operand / f32-accumulate MXU math
        x = x.astype(jnp.bfloat16)
        w_hwio = w_hwio.astype(jnp.bfloat16)
    y = jax.lax.conv_general_dilated(
        x, w_hwio, window_strides=(stride, stride),
        padding=[(pad, pad), (pad, pad)],
        dimension_numbers=('NCHW', 'HWIO', 'NCHW'),
        preferred_element_type=jnp.float32,
        precision=jax.lax.Precision.HIGHEST)
    return y + b.reshape(1, -1, 1, 1)


def reduction_basic_block_ref(x_nchw, params, bf16_operands=True):
    (w1, b1, g1, be1, m1, v1,
     w2, b2, g2, be2, m2, v2,
     ws, bs) = params
    x = x_nchw.astype(jnp.float32)

    def bn(y, g, be, m, v):
        c = y.shape[1]
        rs = lambda a: a.reshape(1, c, 1, 1)
        return (y - rs(m)) / jnp.sqrt(rs(v) + EPS) * rs(g) + rs(be)

    h = jnp.maximum(bn(_conv_nchw(x, w1, b1, 2, 1, bf16_operands), g1, be1, m1, v1), 0.0)
    y = bn(_conv_nchw(h, w2, b2, 1, 1, bf16_operands), g2, be2, m2, v2)
    skip = _conv_nchw(x, ws, bs, 2, 0, bf16_operands)
    return jnp.maximum(y + skip, 0.0)


def make_params(key, cin, cout):
    ks = jax.random.split(key, 14)
    w1 = jax.random.normal(ks[0], (3, 3, cin, cout), jnp.float32) * 0.2   # HWIO
    b1 = jax.random.normal(ks[1], (cout,), jnp.float32) * 0.1
    w2 = jax.random.normal(ks[2], (3, 3, cout, cout), jnp.float32) * 0.2
    b2 = jax.random.normal(ks[3], (cout,), jnp.float32) * 0.1
    ws = jax.random.normal(ks[4], (1, 1, cin, cout), jnp.float32) * 0.2
    bs = jax.random.normal(ks[5], (cout,), jnp.float32) * 0.1
    # eval-mode BatchNorm running stats / affine params (non-trivial, to exercise the fold)
    g1 = 1.0 + 0.1 * jax.random.normal(ks[6], (cout,), jnp.float32)
    be1 = 0.1 * jax.random.normal(ks[7], (cout,), jnp.float32)
    m1 = 0.1 * jax.random.normal(ks[8], (cout,), jnp.float32)
    v1 = 1.0 + 0.1 * jnp.abs(jax.random.normal(ks[9], (cout,), jnp.float32))
    g2 = 1.0 + 0.1 * jax.random.normal(ks[10], (cout,), jnp.float32)
    be2 = 0.1 * jax.random.normal(ks[11], (cout,), jnp.float32)
    m2 = 0.1 * jax.random.normal(ks[12], (cout,), jnp.float32)
    v2 = 1.0 + 0.1 * jnp.abs(jax.random.normal(ks[13], (cout,), jnp.float32))
    return (w1, b1, g1, be1, m1, v1, w2, b2, g2, be2, m2, v2, ws, bs)


if __name__ == "__main__":
    key = jax.random.PRNGKey(0)
    kx, kp = jax.random.split(key)

    N, Cin, H, W = 2, 4, 16, 16
    Cout = 8
    x = jax.random.normal(kx, (N, Cin, H, W), jnp.float32)   # NCHW, like PyTorch
    params = make_params(kp, Cin, Cout)

    out = jax.block_until_ready(reduction_basic_block(x, params))
    ref_bf16 = jax.block_until_ready(reduction_basic_block_ref(x, params, bf16_operands=True))
    ref_f32 = jax.block_until_ready(reduction_basic_block_ref(x, params, bf16_operands=False))

    assert out.shape == (N, Cout, H // 2, W // 2), out.shape
    # tight check vs a reference using the same bf16-operand / f32-accumulate math
    assert jnp.allclose(out, ref_bf16, atol=5e-3, rtol=5e-3), \
        float(jnp.max(jnp.abs(out - ref_bf16)))
    # loose sanity check vs the full-f32 reference (bf16 MXU operand rounding only)
    assert float(jnp.max(jnp.abs(out - ref_f32))) < 1e-1
    print("KERNEL_OK")
</pallas_src>

<mosaic_0001>
module attributes {stable_mosaic.version = 11 : i64} {
  func.func @_reduction_block_kernel(%arg0: i32, %arg1: memref<48x128xbf16, #tpu.memory_space<vmem>>, %arg2: memref<16x48xbf16, #tpu.memory_space<vmem>>, %arg3: memref<8x72xbf16, #tpu.memory_space<vmem>>, %arg4: memref<72x128xbf16, #tpu.memory_space<vmem>>, %arg5: memref<8x1xf32, #tpu.memory_space<vmem>>, %arg6: memref<8x1xf32, #tpu.memory_space<vmem>>, %arg7: memref<8x1xf32, #tpu.memory_space<vmem>>, %arg8: memref<8x1xf32, #tpu.memory_space<vmem>>, %arg9: memref<8x128xf32, #tpu.memory_space<vmem>>) attributes {dimension_semantics = [#tpu.dimension_semantics<parallel>], iteration_bounds = array<i64: 1>, scalar_prefetch = 0 : i64, scratch_operands = 0 : i64, tpu.core_type = #tpu.core_type<tc>, window_params = [{transform_indices = @transform_0, window_bounds = array<i64: 48, 128>}, {pipeline_mode = #tpu.pipeline_mode<synchronous>, transform_indices = @transform_1, window_bounds = array<i64: 16, 48>}, {pipeline_mode = #tpu.pipeline_mode<synchronous>, transform_indices = @transform_2, window_bounds = array<i64: 8, 72>}, {pipeline_mode = #tpu.pipeline_mode<synchronous>, transform_indices = @transform_3, window_bounds = array<i64: 72, 128>}, {pipeline_mode = #tpu.pipeline_mode<synchronous>, transform_indices = @transform_4, window_bounds = array<i64: 8, 1>}, {pipeline_mode = #tpu.pipeline_mode<synchronous>, transform_indices = @transform_5, window_bounds = array<i64: 8, 1>}, {pipeline_mode = #tpu.pipeline_mode<synchronous>, transform_indices = @transform_6, window_bounds = array<i64: 8, 1>}, {pipeline_mode = #tpu.pipeline_mode<synchronous>, transform_indices = @transform_7, window_bounds = array<i64: 8, 1>}, {transform_indices = @transform_8, window_bounds = array<i64: 8, 128>}]} {
    %c0 = arith.constant 0 : index
    %c0_0 = arith.constant 0 : index
    %0 = vector.load %arg2[%c0, %c0_0] : memref<16x48xbf16, #tpu.memory_space<vmem>>, vector<16x48xbf16>
    %c0_1 = arith.constant 0 : index
    %c0_2 = arith.constant 0 : index
    %1 = vector.load %arg1[%c0_1, %c0_2] : memref<48x128xbf16, #tpu.memory_space<vmem>>, vector<48x128xbf16>
    %cst = arith.constant dense<0.000000e+00> : vector<16x128xf32>
    %2 = tpu.matmul %0, %1, %cst {dimension_numbers = #tpu.dot_dimension_numbers<[1], [0], [0], [1], [0, 0, 1, 1], [], []>} : vector<16x48xbf16>, vector<48x128xbf16>, vector<16x128xf32> -> vector<16x128xf32>
    %3 = vector.extract_strided_slice %2 {offsets = [0, 0], sizes = [8, 128], strides = [1, 1]} : vector<16x128xf32> to vector<8x128xf32>
    %4 = vector.extract_strided_slice %2 {offsets = [8, 0], sizes = [8, 128], strides = [1, 1]} : vector<16x128xf32> to vector<8x128xf32>
    %c0_3 = arith.constant 0 : index
    %c0_4 = arith.constant 0 : index
    %5 = vector.load %arg5[%c0_3, %c0_4] : memref<8x1xf32, #tpu.memory_space<vmem>>, vector<8x1xf32>
    %6 = vector.broadcast %5 : vector<8x1xf32> to vector<8x128xf32>
    %7 = arith.mulf %3, %6 : vector<8x128xf32>
    %c0_5 = arith.constant 0 : index
    %c0_6 = arith.constant 0 : index
    %8 = vector.load %arg6[%c0_5, %c0_6] : memref<8x1xf32, #tpu.memory_space<vmem>>, vector<8x1xf32>
    %9 = vector.broadcast %8 : vector<8x1xf32> to vector<8x128xf32>
    %10 = arith.addf %7, %9 : vector<8x128xf32>
    %cst_7 = arith.constant 0.000000e+00 : f32
    %11 = vector.broadcast %cst_7 : f32 to vector<8x128xf32>
    %12 = arith.maximumf %10, %11 : vector<8x128xf32>
    %c9_i32 = arith.constant 9 : i32
    %13 = tpu.dynamic_rotate %12 by %c9_i32 dim 1 : vector<8x128xf32>, i32 -> vector<8x128xf32>
    %c8_i32 = arith.constant 8 : i32
    %14 = tpu.dynamic_rotate %12 by %c8_i32 dim 1 : vector<8x128xf32>, i32 -> vector<8x128xf32>
    %c7_i32 = arith.constant 7 : i32
    %15 = tpu.dynamic_rotate %12 by %c7_i32 dim 1 : vector<8x128xf32>, i32 -> vector<8x128xf32>
    %c1_i32 = arith.constant 1 : i32
    %16 = tpu.dynamic_rotate %12 by %c1_i32 dim 1 : vector<8x128xf32>, i32 -> vector<8x128xf32>
    %c127_i32 = arith.constant 127 : i32
    %17 = tpu.dynamic_rotate %12 by %c127_i32 dim 1 : vector<8x128xf32>, i32 -> vector<8x128xf32>
    %c121_i32 = arith.constant 121 : i32
    %18 = tpu.dynamic_rotate %12 by %c121_i32 dim 1 : vector<8x128xf32>, i32 -> vector<8x128xf32>
    %c120_i32 = arith.constant 120 : i32
    %19 = tpu.dynamic_rotate %12 by %c120_i32 dim 1 : vector<8x128xf32>, i32 -> vector<8x128xf32>
    %c119_i32 = arith.constant 119 : i32
    %20 = tpu.dynamic_rotate %12 by %c119_i32 dim 1 : vector<8x128xf32>, i32 -> vector<8x128xf32>
    %21 = tpu.concatenate %13, %14, %15, %16, %12, %17, %18, %19, %20 in 0 : vector<8x128xf32>, vector<8x128xf32>, vector<8x128xf32>, vector<8x128xf32>, vector<8x128xf32>, vector<8x128xf32>, vector<8x128xf32>, vector<8x128xf32>, vector<8x128xf32> -> vector<72x128xf32>
    %22 = arith.truncf %21 : vector<72x128xf32> to vector<72x128xbf16>
    %c0_8 = arith.constant 0 : index
    %c0_9 = arith.constant 0 : index
    %23 = vector.load %arg4[%c0_8, %c0_9] : memref<72x128xbf16, #tpu.memory_space<vmem>>, vector<72x128xbf16>
    %24 = arith.mulf %22, %23 : vector<72x128xbf16>
    %c0_10 = arith.constant 0 : index
    %c0_11 = arith.constant 0 : index
    %25 = vector.load %arg3[%c0_10, %c0_11] : memref<8x72xbf16, #tpu.memory_space<vmem>>, vector<8x72xbf16>
    %cst_12 = arith.constant dense<0.000000e+00> : vector<8x128xf32>
    %26 = tpu.matmul %25, %24, %cst_12 {dimension_numbers = #tpu.dot_dimension_numbers<[1], [0], [0], [1], [0, 0, 1, 1], [], []>} : vector<8x72xbf16>, vector<72x128xbf16>, vector<8x128xf32> -> vector<8x128xf32>
    %c0_13 = arith.constant 0 : index
    %c0_14 = arith.constant 0 : index
    %27 = vector.load %arg7[%c0_13, %c0_14] : memref<8x1xf32, #tpu.memory_space<vmem>>, vector<8x1xf32>
    %28 = vector.broadcast %27 : vector<8x1xf32> to vector<8x128xf32>
    %29 = arith.mulf %26, %28 : vector<8x128xf32>
    %c0_15 = arith.constant 0 : index
    %c0_16 = arith.constant 0 : index
    %30 = vector.load %arg8[%c0_15, %c0_16] : memref<8x1xf32, #tpu.memory_space<vmem>>, vector<8x1xf32>
    %31 = vector.broadcast %30 : vector<8x1xf32> to vector<8x128xf32>
    %32 = arith.addf %29, %31 : vector<8x128xf32>
    %33 = arith.addf %32, %4 : vector<8x128xf32>
    %cst_17 = arith.constant 0.000000e+00 : f32
    %34 = vector.broadcast %cst_17 : f32 to vector<8x128xf32>
    %35 = arith.maximumf %33, %34 : vector<8x128xf32>
    %c0_18 = arith.constant 0 : index
    %c0_19 = arith.constant 0 : index
    %36 = vector.load %arg9[%c0_18, %c0_19] : memref<8x128xf32, #tpu.memory_space<vmem>>, vector<8x128xf32>
    tpu.vector_store %arg9[%c0_18, %c0_19], %35 {strides = array<i32>} : memref<8x128xf32, #tpu.memory_space<vmem>>, vector<8x128xf32>,
    return
  }
  func.func @transform_0(%arg0: i32) -> (i32, i32) {
    %c0_i32 = arith.constant 0 : i32
    %c0_i32_0 = arith.constant 0 : i32
    return %c0_i32, %arg0 : i32, i32
  }
  func.func @transform_1(%arg0: i32) -> (i32, i32) {
    %c0_i32 = arith.constant 0 : i32
    %c0_i32_0 = arith.constant 0 : i32
    %c0_i32_1 = arith.constant 0 : i32
    return %c0_i32, %c0_i32_0 : i32, i32
  }
  func.func @transform_2(%arg0: i32) -> (i32, i32) {
    %c0_i32 = arith.constant 0 : i32
    %c0_i32_0 = arith.constant 0 : i32
    %c0_i32_1 = arith.constant 0 : i32
    return %c0_i32, %c0_i32_0 : i32, i32
  }
  func.func @transform_3(%arg0: i32) -> (i32, i32) {
    %c0_i32 = arith.constant 0 : i32
    %c0_i32_0 = arith.constant 0 : i32
    %c0_i32_1 = arith.constant 0 : i32
    return %c0_i32, %c0_i32_0 : i32, i32
  }
  func.func @transform_4(%arg0: i32) -> (i32, i32) {
    %c0_i32 = arith.constant 0 : i32
    %c0_i32_0 = arith.constant 0 : i32
    %c0_i32_1 = arith.constant 0 : i32
    return %c0_i32, %c0_i32_0 : i32, i32
  }
  func.func @transform_5(%arg0: i32) -> (i32, i32) {
    %c0_i32 = arith.constant 0 : i32
    %c0_i32_0 = arith.constant 0 : i32
    %c0_i32_1 = arith.constant 0 : i32
    return %c0_i32, %c0_i32_0 : i32, i32
  }
  func.func @transform_6(%arg0: i32) -> (i32, i32) {
    %c0_i32 = arith.constant 0 : i32
    %c0_i32_0 = arith.constant 0 : i32
    %c0_i32_1 = arith.constant 0 : i32
    return %c0_i32, %c0_i32_0 : i32, i32
  }
  func.func @transform_7(%arg0: i32) -> (i32, i32) {
    %c0_i32 = arith.constant 0 : i32
    %c0_i32_0 = arith.constant 0 : i32
    %c0_i32_1 = arith.constant 0 : i32
    return %c0_i32, %c0_i32_0 : i32, i32
  }
  func.func @transform_8(%arg0: i32) -> (i32, i32) {
    %c0_i32 = arith.constant 0 : i32
    %c0_i32_0 = arith.constant 0 : i32
    return %c0_i32, %arg0 : i32, i32
  }
}

</mosaic_0001>

<llo_original>
// kernel: reduction_basic_block.1
$region0: #{reduction_basic_block.1}
  #allocation0 [shape = 'u32[]', space=smem, size = 0x4, offset = 0x4, fixed_abs, tag = 'smem constant byte address 0x4 - core index']
  #allocation1 [shape = 'u32[144,128]{1,0:T(1,128)}', space=vmem, size = 0x12000, scoped, tag = 'internal scratch']
  %s0 = inlined_call_operand.vmem [shape: bf16[48,128], index: 0, kind: input, shape index: {}]
  %s1 = inlined_call_operand.vmem [shape: bf16[16,48], index: 1, kind: input, shape index: {}]
  %s2 = inlined_call_operand.vmem [shape: bf16[8,72], index: 2, kind: input, shape index: {}]
  %s3 = inlined_call_operand.vmem [shape: bf16[72,128], index: 3, kind: input, shape index: {}]
  %s4 = inlined_call_operand.vmem [shape: f32[8,1], index: 4, kind: input, shape index: {}]
  %s5 = inlined_call_operand.vmem [shape: f32[8,1], index: 5, kind: input, shape index: {}]
  %s6 = inlined_call_operand.vmem [shape: f32[8,1], index: 6, kind: input, shape index: {}]
  %s7 = inlined_call_operand.vmem [shape: f32[8,1], index: 7, kind: input, shape index: {}]
  %s8 = inlined_call_operand.vmem [shape: f32[8,128], index: 8, kind: output, shape index: {}]
  %s9 = sld [smem:[#allocation0]]
  $region42: #{reduction_basic_block.1} parent=0
    _
  %s11 = ssub.s32 1, %s9
  %s12 = scalar_select 0, %s11, %s9
  // Predicated region
  $region2: #{reduction_basic_block.1} parent=0 // pred_check
    _
  $region3: #{reduction_basic_block.1} parent=0 // pred_check_branch
    %14 = sbr.rel (0) target = $region5
  $region4: #{reduction_basic_block.1} parent=0 // pred_region
    _
  $region5: #{reduction_basic_block.1} parent=0 // pred_fallthru
    _
  // Predicated region
  $region6: #{reduction_basic_block.1} parent=0 // pred_check
    _
  $region7: #{reduction_basic_block.1} parent=0 // pred_check_branch
    %16 = sbr.rel (0) target = $region9
  $region8: #{reduction_basic_block.1} parent=0 // pred_region
    _
  $region9: #{reduction_basic_block.1} parent=0 // pred_fallthru
    _
  // Predicated region
  $region10: #{reduction_basic_block.1} parent=0 // pred_check
    _
  $region11: #{reduction_basic_block.1} parent=0 // pred_check_branch
    %18 = sbr.rel (0) target = $region13
  $region12: #{reduction_basic_block.1} parent=0 // pred_region
    _
  $region13: #{reduction_basic_block.1} parent=0 // pred_fallthru
    _
  // Predicated region
  $region14: #{reduction_basic_block.1} parent=0 // pred_check
    _
  $region15: #{reduction_basic_block.1} parent=0 // pred_check_branch
    %20 = sbr.rel (0) target = $region17
  $region16: #{reduction_basic_block.1} parent=0 // pred_region
    _
  $region17: #{reduction_basic_block.1} parent=0 // pred_fallthru
    _
  // Predicated region
  $region18: #{reduction_basic_block.1} parent=0 // pred_check
    _
  $region19: #{reduction_basic_block.1} parent=0 // pred_check_branch
    %22 = sbr.rel (0) target = $region21
  $region20: #{reduction_basic_block.1} parent=0 // pred_region
    _
  $region21: #{reduction_basic_block.1} parent=0 // pred_fallthru
    _
  // Predicated region
  $region22: #{reduction_basic_block.1} parent=0 // pred_check
    _
  $region23: #{reduction_basic_block.1} parent=0 // pred_check_branch
    %24 = sbr.rel (0) target = $region25
  $region24: #{reduction_basic_block.1} parent=0 // pred_region
    _
  $region25: #{reduction_basic_block.1} parent=0 // pred_fallthru
    _
  // Predicated region
  $region26: #{reduction_basic_block.1} parent=0 // pred_check
    _
  $region27: #{reduction_basic_block.1} parent=0 // pred_check_branch
    %26 = sbr.rel (0) target = $region29
  $region28: #{reduction_basic_block.1} parent=0 // pred_region
    _
  $region29: #{reduction_basic_block.1} parent=0 // pred_fallthru
    _
  // Predicated region
  $region30: #{reduction_basic_block.1} parent=0 // pred_check
    _
  $region31: #{reduction_basic_block.1} parent=0 // pred_check_branch
    %28 = sbr.rel (0) target = $region33
  $region32: #{reduction_basic_block.1} parent=0 // pred_region
    _
  $region33: #{reduction_basic_block.1} parent=0 // pred_fallthru
    _
  %v30 = vld [vmem:[%s1] sm:$0xf]
  %v31 = vld [vmem:[%s1 + $0x4] sm:$0xf]
  %v32 = vld [vmem:[%s0] sm:$0xf]
  %v33 = vld [vmem:[%s0 + $0x4] sm:$0xf]
  %v34 = vld [vmem:[%s0 + $0x8] sm:$0xf]
  %v35 = vld [vmem:[%s0 + $0xc] sm:$0xf]
  %v36 = vld [vmem:[%s0 + $0x10] sm:$0xf]
  %v37 = vld [vmem:[%s0 + $0x14] sm:$0xf]
  %v40 = vunpack.c.l.b16 %v30
  %v41 = vunpack.c.l.b16 %v31
  %v42 = vpack.c.b16 %v41, %v40
  %v49 = vunpack.c.l.b16 %v32
  %v50 = vunpack.c.l.b16 %v33
  %v51 = vunpack.c.l.b16 %v34
  %v52 = vunpack.c.l.b16 %v35
  %v53 = vunpack.c.l.b16 %v36
  %v54 = vunpack.c.l.b16 %v37
  %v55 = vpack.c.b16 %v50, %v49
  %v56 = vpack.c.b16 %v52, %v51
  %v57 = vpack.c.b16 %v54, %v53
  %vm61 = vcmask 392192
  %v63 = vsel %vm61, %v42, 0
  %65 = vmatprep.subr.bf16.mxu0 0
  %66 = vmatpush1.bf16.msra.mxu0 %v55
  %67 = vmatprep.subr.bf16.mxu0 0
  %68 = vmatpush1.bf16.msra.mxu0 %v56
  %69 = vmatprep.subr.bf16.mxu0 0
  %70 = vmatpush1.bf16.msra.mxu0 %v57
  %71 = vmatprep.subr.bf16.mxu0 0
  %72 = vmatpush1.bf16.msra.mxu0 0
  %73 = vmatprep.subr.bf16.mxu0 0
  %74 = vmatpush1.bf16.msra.mxu0 0
  %75 = vmatprep.subr.bf16.mxu0 0
  %76 = vmatpush1.bf16.msra.mxu0 0
  %77 = vmatprep.subr.bf16.mxu0 0
  %78 = vmatpush1.bf16.msra.mxu0 0
  %79 = vmatprep.subr.bf16.mxu0 0
  %80 = vmatpush1.bf16.msra.mxu0 0
  %81 = vmatprep.subr.bf16.mxu0 0
  %82 = vmatpush1.bf16.msra.mxu0 0
  %83 = vmatprep.subr.bf16.mxu0 0
  %84 = vmatpush1.bf16.msra.mxu0 0
  %85 = vmatprep.subr.bf16.mxu0 0
  %86 = vmatpush1.bf16.msra.mxu0 0
  %87 = vmatprep.subr.bf16.mxu0 0
  %88 = vmatpush1.bf16.msra.mxu0 0
  %89 = vmatprep.subr.bf16.mxu0 0
  %90 = vmatpush1.bf16.msra.mxu0 0
  %91 = vmatprep.subr.bf16.mxu0 0
  %92 = vmatpush1.bf16.msra.mxu0 0
  %93 = vmatprep.subr.bf16.mxu0 0
  %94 = vmatpush1.bf16.msra.mxu0 0
  %95 = vmatprep.subr.bf16.mxu0 0
  %96 = vmatpush1.bf16.msra.mxu0 0
  %97 = vmatprep.mubr.bf16.mxu0 0
  %98 = vmatmul.mubr.bf16.gmra.mrb[0].mxu0 %v63
  %v99 = vpop.f32.mrb[0].mxu0
  %v100 = vadd.f32 0.0, %v99
  %v101 = vpop.f32.mrb[0].mxu0
  %v102 = vpop.f32.mrb[0].mxu0
  %v103 = vadd.f32 0.0, %v102
  %v104 = vpop.f32.mrb[0].mxu0
  %105 = vdwg.mxu0
  %v106 = vld [vmem:[%s4] sm:$0xff]
  %108 = vset.pattern.permute.xlu0 0
  %109 = vperm.xlu0 %108, %v106
  %v110 = vpop.permute.xlu0 %109
  %v112 = vmul.f32 %v100, %v110
  %v113 = vld [vmem:[%s5] sm:$0xff]
  %115 = vset.pattern.permute.xlu0 0
  %116 = vperm.xlu0 %115, %v113
  %v117 = vpop.permute.xlu0 %116
  %v119 = vadd.f32 %v112, %v117
  %v120 = vmax.f32 %v119, 0.0
  %121 = vrot.lane.b32.xlu0 %v120, 9
  %v122 = vpop.permute.xlu0 %121
  %123 = vrot.lane.b32.xlu0 %v120, 8
  %v124 = vpop.permute.xlu0 %123
  %125 = vrot.lane.b32.xlu0 %v120, 7
  %v126 = vpop.permute.xlu0 %125
  %127 = vrot.lane.b32.xlu0 %v120, 1
  %v128 = vpop.permute.xlu0 %127
  %129 = vrot.lane.b32.xlu0 %v120, 127
  %v130 = vpop.permute.xlu0 %129
  %131 = vrot.lane.b32.xlu0 %v120, 121
  %v132 = vpop.permute.xlu0 %131
  %133 = vrot.lane.b32.xlu0 %v120, 120
  %v134 = vpop.permute.xlu0 %133
  %135 = vrot.lane.b32.xlu0 %v120, 119
  %v136 = vpop.permute.xlu0 %135
  %v137 = vpack.c.bf16 %v124, %v122
  %v138 = vpack.c.bf16 %v128, %v126
  %v139 = vpack.c.bf16 %v130, %v120
  %v140 = vpack.c.bf16 %v134, %v132
  %v141 = vpack.c.bf16 %v136, %v136
  %v142 = vld [vmem:[%s3] sm:$0xf]
  %v143 = vld [vmem:[%s3 + $0x4] sm:$0xf]
  %v144 = vld [vmem:[%s3 + $0x8] sm:$0xf]
  %v145 = vld [vmem:[%s3 + $0xc] sm:$0xf]
  %v146 = vld [vmem:[%s3 + $0x10] sm:$0xf]
  %v147 = vld [vmem:[%s3 + $0x14] sm:$0xf]
  %v148 = vld [vmem:[%s3 + $0x18] sm:$0xf]
  %v149 = vld [vmem:[%s3 + $0x1c] sm:$0xf]
  %v150 = vld [vmem:[%s3 + $0x20] sm:$0xf]
  %v160 = vunpack.c.l.b16 %v142
  %v161 = vunpack.c.l.b16 %v143
  %v162 = vunpack.c.l.b16 %v144
  %v163 = vunpack.c.l.b16 %v145
  %v164 = vunpack.c.l.b16 %v146
  %v165 = vunpack.c.l.b16 %v147
  %v166 = vunpack.c.l.b16 %v148
  %v167 = vunpack.c.l.b16 %v149
  %v168 = vunpack.c.l.b16 %v150
  %v169 = vpack.c.b16 %v161, %v160
  %v170 = vpack.c.b16 %v163, %v162
  %v171 = vpack.c.b16 %v165, %v164
  %v172 = vpack.c.b16 %v167, %v166
  %v173 = vpack.c.b16 %v168, %v168
  %v179 = vmul.bf16 %v137, %v169
  %v180 = vmul.bf16 %v138, %v170
  %v181 = vmul.bf16 %v139, %v171
  %v182 = vmul.bf16 %v140, %v172
  %v183 = vmul.bf16 %v141, %v173
  %v184 = vld [vmem:[%s2] sm:$0xf]
  %vm185 = vcmask 588800
  %v187 = vsel %vm185, %v184, 0
  %vm189 = vcmask 1043456
  %v191 = vsel %vm189, %v183, 0
  %193 = vmatprep.subr.bf16.mxu0 0
  %194 = vmatpush1.bf16.msra.mxu0 %v179
  %195 = vmatprep.subr.bf16.mxu0 0
  %196 = vmatpush1.bf16.msra.mxu0 %v180
  %197 = vmatprep.subr.bf16.mxu0 0
  %198 = vmatpush1.bf16.msra.mxu0 %v181
  %199 = vmatprep.subr.bf16.mxu0 0
  %200 = vmatpush1.bf16.msra.mxu0 %v182
  %201 = vmatprep.subr.bf16.mxu0 0
  %202 = vmatpush1.bf16.msra.mxu0 %v191
  %203 = vmatprep.subr.bf16.mxu0 0
  %204 = vmatpush1.bf16.msra.mxu0 0
  %205 = vmatprep.subr.bf16.mxu0 0
  %206 = vmatpush1.bf16.msra.mxu0 0
  %207 = vmatprep.subr.bf16.mxu0 0
  %208 = vmatpush1.bf16.msra.mxu0 0
  %209 = vmatprep.subr.bf16.mxu0 0
  %210 = vmatpush1.bf16.msra.mxu0 0
  %211 = vmatprep.subr.bf16.mxu0 0
  %212 = vmatpush1.bf16.msra.mxu0 0
  %213 = vmatprep.subr.bf16.mxu0 0
  %214 = vmatpush1.bf16.msra.mxu0 0
  %215 = vmatprep.subr.bf16.mxu0 0
  %216 = vmatpush1.bf16.msra.mxu0 0
  %217 = vmatprep.subr.bf16.mxu0 0
  %218 = vmatpush1.bf16.msra.mxu0 0
  %219 = vmatprep.subr.bf16.mxu0 0
  %220 = vmatpush1.bf16.msra.mxu0 0
  %221 = vmatprep.subr.bf16.mxu0 0
  %222 = vmatpush1.bf16.msra.mxu0 0
  %223 = vmatprep.subr.bf16.mxu0 0
  %224 = vmatpush1.bf16.msra.mxu0 0
  %225 = vmatprep.mubr.bf16.mxu0 0
  %226 = vmatmul.mubr.bf16.gmra.mrb[0].mxu0 %v187
  %v227 = vpop.f32.mrb[0].mxu0
  %v228 = vadd.f32 0.0, %v227
  %v229 = vpop.f32.mrb[0].mxu0
  %v230 = vpop.f32.mrb[0].mxu0
  %v231 = vpop.f32.mrb[0].mxu0
  %232 = vdwg.mxu0
  %v233 = vld [vmem:[%s6] sm:$0xff]
  %235 = vset.pattern.permute.xlu0 0
  %236 = vperm.xlu0 %235, %v233
  %v237 = vpop.permute.xlu0 %236
  %v239 = vmul.f32 %v228, %v237
  %v240 = vld [vmem:[%s7] sm:$0xff]
  %242 = vset.pattern.permute.xlu0 0
  %243 = vperm.xlu0 %242, %v240
  %v244 = vpop.permute.xlu0 %243
  %v246 = vadd.f32 %v239, %v244
  %v247 = vadd.f32 %v246, %v103
  %v248 = vmax.f32 %v247, 0.0
  %249 = vst [vmem:[%s8] sm:$0xff] %v248
  // Predicated region
  $region34: #{reduction_basic_block.1} parent=0 // pred_check
    _
  $region35: #{reduction_basic_block.1} parent=0 // pred_check_branch
    %251 = sbr.rel (0) target = $region37
  $region36: #{reduction_basic_block.1} parent=0 // pred_region
    _
  $region37: #{reduction_basic_block.1} parent=0 // pred_fallthru
    _
  // Predicated region
  $region38: #{reduction_basic_block.1} parent=0 // pred_check
    _
  $region39: #{reduction_basic_block.1} parent=0 // pred_check_branch
    %253 = sbr.rel (0) target = $region41
  $region40: #{reduction_basic_block.1} parent=0 // pred_region
    _
  $region41: #{reduction_basic_block.1} parent=0 // pred_fallthru
    _

</llo_original>
